<compile_context>
chip_gen: v5e
topology: v5e:2x2
jax: 0.10.0
libtpu: 0.0.40
codegen_flags: <defaults>
</compile_context>

<pallas_src>
import functools
import math

import jax
import jax.numpy as jnp
from jax.experimental import pallas as pl
from jax.experimental.pallas import tpu as pltpu

_LANES = 128
# (1024, 128) f32 block = 512 KiB; with double-buffered in+out that is ~2 MiB,
# comfortably inside the 32 MiB scoped VMEM budget on every generation.
_MAX_BLOCK_ROWS = 1024


# ----------------------------------------------------------------------------
# Demonstration kernel (NOT on the module hot path): lane-dense tiled copy.
# ----------------------------------------------------------------------------
def _copy_kernel(x_ref, o_ref):
    # TODO(synk): TestModule.method has an empty body (returns None); this
    # copy exists only so the script demonstrates a runnable Pallas kernel.
    o_ref[...] = x_ref[...]


def _identity_slab(x2d):
    """Tiled, double-buffered identity pass over a lane-dense (rows, 128) slab."""
    rows = x2d.shape[0]
    block_rows = min(rows, _MAX_BLOCK_ROWS)
    grid = (pl.cdiv(rows, block_rows),)
    return pl.pallas_call(
        _copy_kernel,
        out_shape=jax.ShapeDtypeStruct(x2d.shape, x2d.dtype),
        grid=grid,
        in_specs=[pl.BlockSpec((block_rows, _LANES), lambda i: (i, 0))],
        out_specs=pl.BlockSpec((block_rows, _LANES), lambda i: (i, 0)),
        input_output_aliases={0: 0},
        compiler_params=pltpu.CompilerParams(
            # Mem-bound copy: shard the row axis across TensorCores (v7x has 2).
            dimension_semantics=("parallel",),
            vmem_limit_bytes=32 * 1024 * 1024,
        ),
    )(x2d)


@functools.partial(jax.jit, donate_argnums=0)
def _identity_pallas(x):
    """Lane-dense identity pass; the jit argument is DONATED so the in/out
    alias inside pallas_call is realized end-to-end (no defensive copy,
    no second HBM writeback).  Do not read `x` after calling this."""
    n = math.prod(x.shape)
    rows = pl.cdiv(n, _LANES)
    flat = x.reshape(-1)
    pad = rows * _LANES - n
    if pad:
        # Pad to a full 128-lane slab so stores are unmasked full-lane vst
        # (masked partial stores are ~4.5x slower on the 1-store-slot v5e).
        flat = jnp.pad(flat, (0, pad))
    y2d = _identity_slab(flat.reshape(rows, _LANES))
    return y2d.reshape(-1)[:n].reshape(x.shape)


# ----------------------------------------------------------------------------
# JAX mirror of the PyTorch TestModule (no parameters, no tensor compute).
# ----------------------------------------------------------------------------
class TestModuleJax:
    """JAX/Pallas mirror of the PyTorch TestModule."""

    def method(self, x):
        # PyTorch `method` is a bare `return` -> None.  Zero device work and
        # zero host syncs on this path (matches reference semantics exactly).
        return None

    def forward(self, x):
        return calls_method(self, x)


def calls_method(c: "TestModuleJax", x):
    return c.method(x)


if __name__ == "__main__":
    key = jax.random.PRNGKey(0)
    # Small NCHW-shaped input consistent with a generic forward(x).
    x = jax.random.normal(key, (2, 4, 16, 16), dtype=jnp.float32)

    # Retain a host-side copy BEFORE donation; x itself is invalidated by the
    # donated jit call and must not be read afterwards.
    x_host = jax.device_get(x)

    # Run the demonstration Pallas kernel once and block on its result.
    y = _identity_pallas(x)
    jax.block_until_ready(y)
    assert y.shape == x_host.shape and y.dtype == jnp.float32
    assert bool(jnp.array_equal(y, jnp.asarray(x_host)))

    # Full module forward: must return None, matching PyTorch semantics,
    # with zero device work and zero host syncs on the call path.
    m = TestModuleJax()
    result = m.forward(jnp.asarray(x_host))
    assert result is None

    print("KERNEL_OK")
</pallas_src>

<mosaic_0001>
module attributes {stable_mosaic.version = 11 : i64} {
  func.func @_copy_kernel(%arg0: i32, %arg1: memref<16x128xf32, #tpu.memory_space<vmem>>, %arg2: memref<16x128xf32, #tpu.memory_space<vmem>>) attributes {dimension_semantics = [#tpu.dimension_semantics<parallel>], iteration_bounds = array<i64: 1>, scalar_prefetch = 0 : i64, scratch_operands = 0 : i64, tpu.core_type = #tpu.core_type<tc>, window_params = [{transform_indices = @transform_0, window_bounds = array<i64: 16, 128>}, {transform_indices = @transform_1, window_bounds = array<i64: 16, 128>}]} {
    %c0 = arith.constant 0 : index
    %c0_0 = arith.constant 0 : index
    %0 = vector.load %arg1[%c0, %c0_0] : memref<16x128xf32, #tpu.memory_space<vmem>>, vector<16x128xf32>
    %c0_1 = arith.constant 0 : index
    %c0_2 = arith.constant 0 : index
    %1 = vector.load %arg2[%c0_1, %c0_2] : memref<16x128xf32, #tpu.memory_space<vmem>>, vector<16x128xf32>
    tpu.vector_store %arg2[%c0_1, %c0_2], %0 {strides = array<i32>} : memref<16x128xf32, #tpu.memory_space<vmem>>, vector<16x128xf32>,
    return
  }
  func.func @transform_0(%arg0: i32) -> (i32, i32) {
    %c0_i32 = arith.constant 0 : i32
    %c0_i32_0 = arith.constant 0 : i32
    return %arg0, %c0_i32 : i32, i32
  }
  func.func @transform_1(%arg0: i32) -> (i32, i32) {
    %c0_i32 = arith.constant 0 : i32
    %c0_i32_0 = arith.constant 0 : i32
    return %arg0, %c0_i32 : i32, i32
  }
}

</mosaic_0001>

<llo_original>
// kernel: _identity_pallas.1
$region0: #{_identity_pallas.1}
  #allocation0 [shape = 'u32[]', space=smem, size = 0x4, offset = 0x4, fixed_abs, tag = 'smem constant byte address 0x4 - core index']
  #allocation1 [shape = 'u32[72,128]{1,0:T(1,128)}', space=vmem, size = 0x9000, scoped, tag = 'internal scratch']
  %s0 = inlined_call_operand.vmem [shape: f32[16,128], index: 0, kind: input, shape index: {}, may-alias: {0,1}]
  %s1 = inlined_call_operand.vmem [shape: f32[16,128], index: 1, kind: output, shape index: {}, may-alias: {0,1}]
  %s2 = sld [smem:[#allocation0]]
  $region14: #{_identity_pallas.1} parent=0
    _
  %s4 = ssub.s32 1, %s2
  %s5 = scalar_select 0, %s4, %s2
  // Predicated region
  $region2: #{_identity_pallas.1} parent=0 // pred_check
    _
  $region3: #{_identity_pallas.1} parent=0 // pred_check_branch
    %7 = sbr.rel (0) target = $region5
  $region4: #{_identity_pallas.1} parent=0 // pred_region
    _
  $region5: #{_identity_pallas.1} parent=0 // pred_fallthru
    _
  %v8 = vld [vmem:[%s0] sm:$0xff]
  %v9 = vld [vmem:[%s0 + $0x8] sm:$0xff]
  %10 = vst [vmem:[%s1] sm:$0xff] %v8
  %11 = vst [vmem:[%s1 + $0x8] sm:$0xff] %v9
  // Predicated region
  $region6: #{_identity_pallas.1} parent=0 // pred_check
    _
  $region7: #{_identity_pallas.1} parent=0 // pred_check_branch
    %13 = sbr.rel (0) target = $region9
  $region8: #{_identity_pallas.1} parent=0 // pred_region
    _
  $region9: #{_identity_pallas.1} parent=0 // pred_fallthru
    _
  // Predicated region
  $region10: #{_identity_pallas.1} parent=0 // pred_check
    _
  $region11: #{_identity_pallas.1} parent=0 // pred_check_branch
    %15 = sbr.rel (0) target = $region13
  $region12: #{_identity_pallas.1} parent=0 // pred_region
    _
  $region13: #{_identity_pallas.1} parent=0 // pred_fallthru
    _

</llo_original>
